<compile_context>
chip_gen: v5e
topology: v5e:2x2
jax: 0.10.0
libtpu: 0.0.40
codegen_flags: <defaults>
</compile_context>

<pallas_src>
import functools
import math

import jax
import jax.numpy as jnp
from jax.experimental import pallas as pl
from jax.experimental.pallas import tpu as pltpu

INV_SQRT2 = 1.0 / math.sqrt(2.0)


# ----------------------------------------------------------------------------
# Shared GroupNorm(32, H) helper, mapped onto the MXU.
#   gmat    : (H, G)  channel->group one-hot pre-scaled by 1/group_size
#   gmat_tg : (G, H)  group->channel one-hot with gamma folded in
# ----------------------------------------------------------------------------
def _group_norm(h, gmat, gmat_tg, beta, eps):
    mean_g = jnp.dot(h, gmat, preferred_element_type=jnp.float32)       # (T, G)
    ex2_g = jnp.dot(h * h, gmat, preferred_element_type=jnp.float32)    # (T, G)
    var_g = jnp.maximum(ex2_g - mean_g * mean_g, 0.0)    # clamp one-pass var
    inv_std = jax.lax.rsqrt(var_g + eps)                                # EUP
    scale_c = jnp.dot(inv_std, gmat_tg,
                      preferred_element_type=jnp.float32)               # gamma/std
    shift_c = jnp.dot(mean_g * inv_std, gmat_tg,
                      preferred_element_type=jnp.float32)               # gamma*mu/std
    return h * scale_c + (beta - shift_c)


# ----------------------------------------------------------------------------
# Path A: all weights resident in VMEM, grid = (batch tiles,)
# ----------------------------------------------------------------------------
def fcnet_resident_kernel(x_ref, map_w_ref, map_b_ref, gmat_ref, gtg_ref,
                          small_ref, blk_w_ref, o_ref, *, eps, num_res_blocks):
    # h = self.map(x)
    h = (jnp.dot(x_ref[...].astype(jnp.bfloat16), map_w_ref[...],
                 preferred_element_type=jnp.float32) + map_b_ref[...])
    for r in range(num_res_blocks):
        blk = small_ref[r]                               # (4, H): [beta, b0, b1, b2]
        hn = _group_norm(h, gmat_ref[...], gtg_ref[r], blk[0:1], eps)
        act = hn
        for j in range(3):                               # 3 x (Linear + SiLU)
            act = (jnp.dot(act.astype(jnp.bfloat16), blk_w_ref[3 * r + j],
                           preferred_element_type=jnp.float32)
                   + blk[j + 1:j + 2])
            act = act * jax.nn.sigmoid(act)              # SiLU (f32)
        h = (h + act) * INV_SQRT2
    o_ref[...] = h


# ----------------------------------------------------------------------------
# Path B: per-linear weight streaming, grid = (batch tiles, res blocks, 3)
#   h lives in the (resident) output block; the running activation of the
#   current res block lives in a VMEM scratch.
# ----------------------------------------------------------------------------
def fcnet_streamed_kernel(x_ref, map_w_ref, map_b_ref, gmat_ref, gtg_ref,
                          small_ref, w_ref, o_ref, racc_ref, *, eps):
    r_idx = pl.program_id(1)
    j_idx = pl.program_id(2)

    # h = self.map(x) once per batch tile.
    @pl.when((r_idx == 0) & (j_idx == 0))
    def _():
        o_ref[...] = (jnp.dot(x_ref[...].astype(jnp.bfloat16), map_w_ref[...],
                              preferred_element_type=jnp.float32)
                      + map_b_ref[...])

    # GroupNorm at the first linear of each res block.
    @pl.when(j_idx == 0)
    def _():
        blk = small_ref[0]                               # (4, H)
        racc_ref[...] = _group_norm(o_ref[...], gmat_ref[...], gtg_ref[0],
                                    blk[0:1], eps)

    # One Linear + SiLU per grid step; the weight is streamed as (1, H, H).
    bias = small_ref[0, pl.ds(j_idx + 1, 1), :]          # (1, H)
    act = (jnp.dot(racc_ref[...].astype(jnp.bfloat16), w_ref[0],
                   preferred_element_type=jnp.float32) + bias)
    act = act * jax.nn.sigmoid(act)                      # SiLU (f32)
    racc_ref[...] = act

    # Residual + 1/sqrt(2) after the third linear of the block.
    @pl.when(j_idx == 2)
    def _():
        o_ref[...] = (o_ref[...] + act) * INV_SQRT2


# ----------------------------------------------------------------------------
# Host-side helpers
# ----------------------------------------------------------------------------
def _round_up(x, m):
    return ((x + m - 1) // m) * m


def _vmem_budget_bytes():
    cap = 64 * 1024 * 1024
    try:
        info = pltpu.get_tpu_info()
        cap = int(getattr(info, "vmem_capacity_bytes", cap))
    except Exception:
        pass
    # Never pin the full physical VMEM; leave headroom for compiler scratch.
    # (~51 MiB on v7x's 64 MiB, ~102 MiB on v5e/v6e's 128 MiB.)
    return int(cap * 0.8)


def _derived_constants(gamma, beta, blk_b, hidden_dim, num_groups):
    R, H, G = gamma.shape[0], hidden_dim, num_groups
    gs = H // G
    onehot = (jnp.arange(H)[:, None] // gs
              == jnp.arange(G)[None, :]).astype(jnp.float32)          # (H, G)
    gmat = onehot / gs                                                 # mean / E[x^2]
    gmat_tg = onehot.T[None] * gamma[:, None, :]                       # (R, G, H)
    small = jnp.concatenate([beta[:, None, :],
                             blk_b.reshape(R, 3, H)], axis=1)          # (R, 4, H)
    return gmat, gmat_tg, small


def fcnet_forward(x, params, *, num_res_blocks, num_groups=32, eps=1e-5,
                  tile_b=None, force_streamed=False):
    map_w, map_b, gamma, beta, blk_w, blk_b = params
    B, D = x.shape
    H = map_w.shape[1]
    G = num_groups
    R = num_res_blocks

    gmat, gmat_tg, small = _derived_constants(gamma, beta, blk_b, H, G)
    map_b2 = map_b.reshape(1, H)

    budget = _vmem_budget_bytes()

    # Fixed (batch-independent) VMEM footprint, conservatively double-buffered.
    base_fixed = 2 * (D * H * 2 + H * 4 + H * G * 4)          # map_w/map_b/gmat
    resident_fixed = base_fixed + 2 * (R * 3 * H * H * 2 + R * G * H * 4
                                       + R * 4 * H * 4)
    streamed_fixed = base_fixed + 2 * (H * H * 2 + G * H * 4 + 4 * H * 4)
    resident = ((not force_streamed)
                and resident_fixed <= min(24 << 20, budget // 3))
    fixed = resident_fixed if resident else streamed_fixed

    if tile_b is None:
        tile_b = min(512, _round_up(B, 8))
        if B >= 256:
            # Keep >= 2 batch tiles so the "parallel" axis splits across the
            # two v7x TensorCores.
            tile_b = min(tile_b, _round_up(-(-B // 2), 8))
        per_row = 2 * D * 4 + 2 * H * 4 + 8 * H * 4   # x/out blocks + temps
        if not resident:
            per_row += H * 4                          # r-activation scratch
        cap = (budget - fixed) // max(per_row, 1)
        cap = max(8, (cap // 8) * 8)
        tile_b = max(8, min(tile_b, cap))

    n_tiles = -(-B // tile_b)
    B_pad = n_tiles * tile_b
    if B_pad != B:
        x = jnp.pad(x, ((0, B_pad - B), (0, 0)))

    # Advisory cost estimate (weights are re-streamed per batch tile in the
    # streamed path).
    mm_flops = 2 * B_pad * D * H + R * (6 * B_pad * H * H + 8 * B_pad * H * G)
    transcendentals = R * (3 * B_pad * H + B_pad * G)
    weight_bytes = blk_w.size * 2 + gmat_tg.size * 4 + small.size * 4
    const_bytes = map_w.size * 2 + map_b2.size * 4 + gmat.size * 4
    bytes_accessed = (x.size * 4 + B_pad * H * 4 + const_bytes
                      + (weight_bytes if resident else n_tiles * weight_bytes))
    cost = pl.CostEstimate(flops=int(mm_flops),
                           transcendentals=int(transcendentals),
                           bytes_accessed=int(bytes_accessed))

    if resident:
        kernel = functools.partial(fcnet_resident_kernel, eps=eps,
                                   num_res_blocks=R)
        out = pl.pallas_call(
            kernel,
            out_shape=jax.ShapeDtypeStruct((B_pad, H), jnp.float32),
            grid_spec=pltpu.PrefetchScalarGridSpec(
                num_scalar_prefetch=0,
                grid=(n_tiles,),
                in_specs=[
                    pl.BlockSpec((tile_b, D), lambda i: (i, 0)),        # x
                    pl.BlockSpec((D, H), lambda i: (0, 0)),             # map_w
                    pl.BlockSpec((1, H), lambda i: (0, 0)),             # map_b
                    pl.BlockSpec((H, G), lambda i: (0, 0)),             # gmat
                    pl.BlockSpec((R, G, H), lambda i: (0, 0, 0)),       # gamma-folded bcast
                    pl.BlockSpec((R, 4, H), lambda i: (0, 0, 0)),       # beta + biases
                    pl.BlockSpec((R * 3, H, H), lambda i: (0, 0, 0)),   # all res weights
                ],
                out_specs=pl.BlockSpec((tile_b, H), lambda i: (i, 0)),
            ),
            compiler_params=pltpu.CompilerParams(
                dimension_semantics=("parallel",),
                vmem_limit_bytes=budget),
            cost_estimate=cost,
        )(x, map_w, map_b2, gmat, gmat_tg, small, blk_w)
    else:
        kernel = functools.partial(fcnet_streamed_kernel, eps=eps)
        out = pl.pallas_call(
            kernel,
            out_shape=jax.ShapeDtypeStruct((B_pad, H), jnp.float32),
            grid_spec=pltpu.PrefetchScalarGridSpec(
                num_scalar_prefetch=0,
                grid=(n_tiles, R, 3),
                in_specs=[
                    pl.BlockSpec((tile_b, D), lambda i, r, j: (i, 0)),       # x
                    pl.BlockSpec((D, H), lambda i, r, j: (0, 0)),            # map_w
                    pl.BlockSpec((1, H), lambda i, r, j: (0, 0)),            # map_b
                    pl.BlockSpec((H, G), lambda i, r, j: (0, 0)),            # gmat
                    pl.BlockSpec((1, G, H), lambda i, r, j: (r, 0, 0)),      # gamma-folded
                    pl.BlockSpec((1, 4, H), lambda i, r, j: (r, 0, 0)),      # beta + biases
                    pl.BlockSpec((1, H, H),
                                 lambda i, r, j: (3 * r + j, 0, 0)),         # one linear
                ],
                out_specs=pl.BlockSpec((tile_b, H), lambda i, r, j: (i, 0)),
                scratch_shapes=[pltpu.VMEM((tile_b, H), jnp.float32)],       # r-act carry
            ),
            compiler_params=pltpu.CompilerParams(
                dimension_semantics=("parallel", "arbitrary", "arbitrary"),
                vmem_limit_bytes=budget),
            cost_estimate=cost,
        )(x, map_w, map_b2, gmat, gmat_tg, small, blk_w)
    return out[:B]


# ----------------------------------------------------------------------------
# Pure-JAX reference matching PyTorch FCnet.forward semantics (f32 math).
# ----------------------------------------------------------------------------
def fcnet_reference(x, params, *, num_res_blocks, num_groups=32, eps=1e-5):
    map_w, map_b, gamma, beta, blk_w, blk_b = params
    h = x @ map_w.astype(jnp.float32) + map_b
    B, H = h.shape
    gs = H // num_groups
    for i in range(num_res_blocks):
        hg = h.reshape(B, num_groups, gs)
        mean = hg.mean(axis=-1, keepdims=True)
        var = hg.var(axis=-1, keepdims=True)            # biased, like GroupNorm
        hn = ((hg - mean) * jax.lax.rsqrt(var + eps)).reshape(B, H)
        hn = hn * gamma[i] + beta[i]
        r = hn
        for j in range(3):
            r = r @ blk_w[3 * i + j].astype(jnp.float32) + blk_b[3 * i + j]
            r = r * jax.nn.sigmoid(r)
        h = (h + r) / jnp.sqrt(2.0)
    return h


def make_params(key, data_dim, hidden_dim, num_res_blocks):
    R = num_res_blocks
    keys = jax.random.split(key, 2 + 6 * R)
    k = iter(keys)
    # map: Linear(data_dim, hidden_dim) stored (in, out); bf16 for the MXU.
    map_w = (jax.random.normal(next(k), (data_dim, hidden_dim), jnp.float32)
             * 0.05).astype(jnp.bfloat16)
    map_b = jax.random.normal(next(k), (hidden_dim,), jnp.float32) * 0.05
    # GroupNorm affine params (perturbed from the PyTorch 1/0 init so they matter).
    gamma = 1.0 + 0.1 * jnp.sin(
        jnp.arange(R * hidden_dim, dtype=jnp.float32)).reshape(R, hidden_dim)
    beta = 0.05 * jnp.cos(
        jnp.arange(R * hidden_dim, dtype=jnp.float32)).reshape(R, hidden_dim)
    # res-block linears: R * 3 of Linear(hidden, hidden), bf16 weights.
    blk_w = jnp.stack([
        (jax.random.normal(next(k), (hidden_dim, hidden_dim), jnp.float32)
         * 0.05).astype(jnp.bfloat16) for _ in range(3 * R)])
    blk_b = jnp.stack([
        jax.random.normal(next(k), (hidden_dim,), jnp.float32) * 0.05
        for _ in range(3 * R)])
    return map_w, map_b, gamma, beta, blk_w, blk_b


if __name__ == "__main__":
    # Small shapes consistent with the module (hidden_dim divisible by 32).
    B, DATA_DIM, HIDDEN_DIM, NUM_RES_BLOCKS = 8, 64, 128, 2

    key = jax.random.PRNGKey(0)
    kx, kp = jax.random.split(key)
    x = jax.random.normal(kx, (B, DATA_DIM), jnp.float32)
    params = make_params(kp, DATA_DIM, HIDDEN_DIM, NUM_RES_BLOCKS)

    ref = fcnet_reference(x, params, num_res_blocks=NUM_RES_BLOCKS)

    # Path A: weights resident in VMEM (the toy/small-H configuration).
    out = jax.block_until_ready(
        fcnet_forward(x, params, num_res_blocks=NUM_RES_BLOCKS))
    assert out.shape == (B, HIDDEN_DIM)
    assert jnp.allclose(out, ref, atol=3e-2, rtol=3e-2), (
        f"resident path max abs diff {jnp.max(jnp.abs(out - ref))}")

    # Path B: per-linear weight streaming (the large-H / v7x configuration),
    # exercised here at toy sizes for correctness.
    out_s = jax.block_until_ready(
        fcnet_forward(x, params, num_res_blocks=NUM_RES_BLOCKS,
                      force_streamed=True))
    assert jnp.allclose(out_s, ref, atol=3e-2, rtol=3e-2), (
        f"streamed path max abs diff {jnp.max(jnp.abs(out_s - ref))}")

    print("KERNEL_OK")
</pallas_src>

<mosaic_0001>
module attributes {stable_mosaic.version = 11 : i64} {
  func.func @fcnet_resident_kernel(%arg0: i32, %arg1: memref<8x64xf32, #tpu.memory_space<vmem>>, %arg2: memref<64x128xbf16, #tpu.memory_space<vmem>>, %arg3: memref<1x128xf32, #tpu.memory_space<vmem>>, %arg4: memref<128x32xf32, #tpu.memory_space<vmem>>, %arg5: memref<2x32x128xf32, #tpu.memory_space<vmem>>, %arg6: memref<2x4x128xf32, #tpu.memory_space<vmem>>, %arg7: memref<6x128x128xbf16, #tpu.memory_space<vmem>>, %arg8: memref<8x128xf32, #tpu.memory_space<vmem>>) attributes {dimension_semantics = [#tpu.dimension_semantics<parallel>], iteration_bounds = array<i64: 1>, scalar_prefetch = 0 : i64, scratch_operands = 0 : i64, tpu.core_type = #tpu.core_type<tc>, window_params = [{transform_indices = @transform_0, window_bounds = array<i64: 8, 64>}, {pipeline_mode = #tpu.pipeline_mode<synchronous>, transform_indices = @transform_1, window_bounds = array<i64: 64, 128>}, {pipeline_mode = #tpu.pipeline_mode<synchronous>, transform_indices = @transform_2, window_bounds = array<i64: 1, 128>}, {pipeline_mode = #tpu.pipeline_mode<synchronous>, transform_indices = @transform_3, window_bounds = array<i64: 128, 32>}, {pipeline_mode = #tpu.pipeline_mode<synchronous>, transform_indices = @transform_4, window_bounds = array<i64: 2, 32, 128>}, {pipeline_mode = #tpu.pipeline_mode<synchronous>, transform_indices = @transform_5, window_bounds = array<i64: 2, 4, 128>}, {pipeline_mode = #tpu.pipeline_mode<synchronous>, transform_indices = @transform_6, window_bounds = array<i64: 6, 128, 128>}, {transform_indices = @transform_7, window_bounds = array<i64: 8, 128>}]} {
    %c0 = arith.constant 0 : index
    %c0_0 = arith.constant 0 : index
    %0 = vector.load %arg1[%c0, %c0_0] : memref<8x64xf32, #tpu.memory_space<vmem>>, vector<8x64xf32>
    %1 = arith.truncf %0 : vector<8x64xf32> to vector<8x64xbf16>
    %c0_1 = arith.constant 0 : index
    %c0_2 = arith.constant 0 : index
    %2 = vector.load %arg2[%c0_1, %c0_2] : memref<64x128xbf16, #tpu.memory_space<vmem>>, vector<64x128xbf16>
    %cst = arith.constant dense<0.000000e+00> : vector<8x128xf32>
    %3 = tpu.matmul %1, %2, %cst {dimension_numbers = #tpu.dot_dimension_numbers<[1], [0], [0], [1], [0, 0, 1, 1], [], []>} : vector<8x64xbf16>, vector<64x128xbf16>, vector<8x128xf32> -> vector<8x128xf32>
    %c0_3 = arith.constant 0 : index
    %c0_4 = arith.constant 0 : index
    %4 = vector.load %arg3[%c0_3, %c0_4] : memref<1x128xf32, #tpu.memory_space<vmem>>, vector<1x128xf32>
    %5 = vector.broadcast %4 : vector<1x128xf32> to vector<8x128xf32>
    %6 = arith.addf %3, %5 : vector<8x128xf32>
    %c0_5 = arith.constant 0 : index
    %c0_6 = arith.constant 0 : index
    %c0_7 = arith.constant 0 : index
    %7 = vector.load %arg6[%c0_5, %c0_6, %c0_7] : memref<2x4x128xf32, #tpu.memory_space<vmem>>, vector<1x4x128xf32>
    %8 = vector.shape_cast %7 : vector<1x4x128xf32> to vector<4x128xf32>
    %c0_8 = arith.constant 0 : index
    %c0_9 = arith.constant 0 : index
    %9 = vector.load %arg4[%c0_8, %c0_9] : memref<128x32xf32, #tpu.memory_space<vmem>>, vector<128x32xf32>
    %c0_10 = arith.constant 0 : index
    %c0_11 = arith.constant 0 : index
    %c0_12 = arith.constant 0 : index
    %10 = vector.load %arg5[%c0_10, %c0_11, %c0_12] : memref<2x32x128xf32, #tpu.memory_space<vmem>>, vector<1x32x128xf32>
    %11 = vector.shape_cast %10 : vector<1x32x128xf32> to vector<32x128xf32>
    %12 = vector.extract_strided_slice %8 {offsets = [0, 0], sizes = [1, 128], strides = [1, 1]} : vector<4x128xf32> to vector<1x128xf32>
    %cst_13 = arith.constant dense<0.000000e+00> : vector<8x32xf32>
    %13 = tpu.matmul %6, %9, %cst_13 {dimension_numbers = #tpu.dot_dimension_numbers<[1], [0], [0], [1], [0, 0, 1, 1], [], []>} : vector<8x128xf32>, vector<128x32xf32>, vector<8x32xf32> -> vector<8x32xf32>
    %14 = arith.mulf %6, %6 : vector<8x128xf32>
    %cst_14 = arith.constant dense<0.000000e+00> : vector<8x32xf32>
    %15 = tpu.matmul %14, %9, %cst_14 {dimension_numbers = #tpu.dot_dimension_numbers<[1], [0], [0], [1], [0, 0, 1, 1], [], []>} : vector<8x128xf32>, vector<128x32xf32>, vector<8x32xf32> -> vector<8x32xf32>
    %16 = arith.mulf %13, %13 : vector<8x32xf32>
    %17 = arith.subf %15, %16 : vector<8x32xf32>
    %cst_15 = arith.constant 0.000000e+00 : f32
    %18 = vector.broadcast %cst_15 : f32 to vector<8x32xf32>
    %19 = arith.maximumf %17, %18 : vector<8x32xf32>
    %cst_16 = arith.constant 9.99999974E-6 : f32
    %20 = vector.broadcast %cst_16 : f32 to vector<8x32xf32>
    %21 = arith.addf %19, %20 : vector<8x32xf32>
    %22 = math.rsqrt %21 : vector<8x32xf32>
    %cst_17 = arith.constant dense<0.000000e+00> : vector<8x128xf32>
    %23 = tpu.matmul %22, %11, %cst_17 {dimension_numbers = #tpu.dot_dimension_numbers<[1], [0], [0], [1], [0, 0, 1, 1], [], []>} : vector<8x32xf32>, vector<32x128xf32>, vector<8x128xf32> -> vector<8x128xf32>
    %24 = arith.mulf %13, %22 : vector<8x32xf32>
    %cst_18 = arith.constant dense<0.000000e+00> : vector<8x128xf32>
    %25 = tpu.matmul %24, %11, %cst_18 {dimension_numbers = #tpu.dot_dimension_numbers<[1], [0], [0], [1], [0, 0, 1, 1], [], []>} : vector<8x32xf32>, vector<32x128xf32>, vector<8x128xf32> -> vector<8x128xf32>
    %26 = arith.mulf %6, %23 : vector<8x128xf32>
    %27 = vector.broadcast %12 : vector<1x128xf32> to vector<8x128xf32>
    %28 = arith.subf %27, %25 : vector<8x128xf32>
    %29 = arith.addf %26, %28 : vector<8x128xf32>
    %30 = arith.truncf %29 : vector<8x128xf32> to vector<8x128xbf16>
    %c0_19 = arith.constant 0 : index
    %c0_20 = arith.constant 0 : index
    %c0_21 = arith.constant 0 : index
    %31 = vector.load %arg7[%c0_19, %c0_20, %c0_21] : memref<6x128x128xbf16, #tpu.memory_space<vmem>>, vector<1x128x128xbf16>
    %32 = vector.shape_cast %31 : vector<1x128x128xbf16> to vector<128x128xbf16>
    %cst_22 = arith.constant dense<0.000000e+00> : vector<8x128xf32>
    %33 = tpu.matmul %30, %32, %cst_22 {dimension_numbers = #tpu.dot_dimension_numbers<[1], [0], [0], [1], [0, 0, 1, 1], [], []>} : vector<8x128xbf16>, vector<128x128xbf16>, vector<8x128xf32> -> vector<8x128xf32>
    %34 = vector.extract_strided_slice %8 {offsets = [1, 0], sizes = [1, 128], strides = [1, 1]} : vector<4x128xf32> to vector<1x128xf32>
    %35 = vector.broadcast %34 : vector<1x128xf32> to vector<8x128xf32>
    %36 = arith.addf %33, %35 : vector<8x128xf32>
    %37 = arith.negf %36 : vector<8x128xf32>
    %38 = math.exp %37 : vector<8x128xf32>
    %cst_23 = arith.constant 1.000000e+00 : f32
    %39 = vector.broadcast %cst_23 : f32 to vector<8x128xf32>
    %40 = arith.addf %39, %38 : vector<8x128xf32>
    %41 = arith.divf %39, %40 : vector<8x128xf32>
    %42 = arith.mulf %36, %41 : vector<8x128xf32>
    %43 = arith.truncf %42 : vector<8x128xf32> to vector<8x128xbf16>
    %c1 = arith.constant 1 : index
    %c0_24 = arith.constant 0 : index
    %c0_25 = arith.constant 0 : index
    %44 = vector.load %arg7[%c1, %c0_24, %c0_25] : memref<6x128x128xbf16, #tpu.memory_space<vmem>>, vector<1x128x128xbf16>
    %45 = vector.shape_cast %44 : vector<1x128x128xbf16> to vector<128x128xbf16>
    %cst_26 = arith.constant dense<0.000000e+00> : vector<8x128xf32>
    %46 = tpu.matmul %43, %45, %cst_26 {dimension_numbers = #tpu.dot_dimension_numbers<[1], [0], [0], [1], [0, 0, 1, 1], [], []>} : vector<8x128xbf16>, vector<128x128xbf16>, vector<8x128xf32> -> vector<8x128xf32>
    %47 = vector.extract_strided_slice %8 {offsets = [2, 0], sizes = [1, 128], strides = [1, 1]} : vector<4x128xf32> to vector<1x128xf32>
    %48 = vector.broadcast %47 : vector<1x128xf32> to vector<8x128xf32>
    %49 = arith.addf %46, %48 : vector<8x128xf32>
    %50 = arith.negf %49 : vector<8x128xf32>
    %51 = math.exp %50 : vector<8x128xf32>
    %cst_27 = arith.constant 1.000000e+00 : f32
    %52 = vector.broadcast %cst_27 : f32 to vector<8x128xf32>
    %53 = arith.addf %52, %51 : vector<8x128xf32>
    %54 = arith.divf %52, %53 : vector<8x128xf32>
    %55 = arith.mulf %49, %54 : vector<8x128xf32>
    %56 = arith.truncf %55 : vector<8x128xf32> to vector<8x128xbf16>
    %c2 = arith.constant 2 : index
    %c0_28 = arith.constant 0 : index
    %c0_29 = arith.constant 0 : index
    %57 = vector.load %arg7[%c2, %c0_28, %c0_29] : memref<6x128x128xbf16, #tpu.memory_space<vmem>>, vector<1x128x128xbf16>
    %58 = vector.shape_cast %57 : vector<1x128x128xbf16> to vector<128x128xbf16>
    %cst_30 = arith.constant dense<0.000000e+00> : vector<8x128xf32>
    %59 = tpu.matmul %56, %58, %cst_30 {dimension_numbers = #tpu.dot_dimension_numbers<[1], [0], [0], [1], [0, 0, 1, 1], [], []>} : vector<8x128xbf16>, vector<128x128xbf16>, vector<8x128xf32> -> vector<8x128xf32>
    %60 = vector.extract_strided_slice %8 {offsets = [3, 0], sizes = [1, 128], strides = [1, 1]} : vector<4x128xf32> to vector<1x128xf32>
    %61 = vector.broadcast %60 : vector<1x128xf32> to vector<8x128xf32>
    %62 = arith.addf %59, %61 : vector<8x128xf32>
    %63 = arith.negf %62 : vector<8x128xf32>
    %64 = math.exp %63 : vector<8x128xf32>
    %cst_31 = arith.constant 1.000000e+00 : f32
    %65 = vector.broadcast %cst_31 : f32 to vector<8x128xf32>
    %66 = arith.addf %65, %64 : vector<8x128xf32>
    %67 = arith.divf %65, %66 : vector<8x128xf32>
    %68 = arith.mulf %62, %67 : vector<8x128xf32>
    %69 = arith.addf %6, %68 : vector<8x128xf32>
    %cst_32 = arith.constant 0.707106769 : f32
    %70 = vector.broadcast %cst_32 : f32 to vector<8x128xf32>
    %71 = arith.mulf %69, %70 : vector<8x128xf32>
    %c1_33 = arith.constant 1 : index
    %c0_34 = arith.constant 0 : index
    %c0_35 = arith.constant 0 : index
    %72 = vector.load %arg6[%c1_33, %c0_34, %c0_35] : memref<2x4x128xf32, #tpu.memory_space<vmem>>, vector<1x4x128xf32>
    %73 = vector.shape_cast %72 : vector<1x4x128xf32> to vector<4x128xf32>
    %c0_36 = arith.constant 0 : index
    %c0_37 = arith.constant 0 : index
    %74 = vector.load %arg4[%c0_36, %c0_37] : memref<128x32xf32, #tpu.memory_space<vmem>>, vector<128x32xf32>
    %c1_38 = arith.constant 1 : index
    %c0_39 = arith.constant 0 : index
    %c0_40 = arith.constant 0 : index
    %75 = vector.load %arg5[%c1_38, %c0_39, %c0_40] : memref<2x32x128xf32, #tpu.memory_space<vmem>>, vector<1x32x128xf32>
    %76 = vector.shape_cast %75 : vector<1x32x128xf32> to vector<32x128xf32>
    %77 = vector.extract_strided_slice %73 {offsets = [0, 0], sizes = [1, 128], strides = [1, 1]} : vector<4x128xf32> to vector<1x128xf32>
    %cst_41 = arith.constant dense<0.000000e+00> : vector<8x32xf32>
    %78 = tpu.matmul %71, %74, %cst_41 {dimension_numbers = #tpu.dot_dimension_numbers<[1], [0], [0], [1], [0, 0, 1, 1], [], []>} : vector<8x128xf32>, vector<128x32xf32>, vector<8x32xf32> -> vector<8x32xf32>
    %79 = arith.mulf %71, %71 : vector<8x128xf32>
    %cst_42 = arith.constant dense<0.000000e+00> : vector<8x32xf32>
    %80 = tpu.matmul %79, %74, %cst_42 {dimension_numbers = #tpu.dot_dimension_numbers<[1], [0], [0], [1], [0, 0, 1, 1], [], []>} : vector<8x128xf32>, vector<128x32xf32>, vector<8x32xf32> -> vector<8x32xf32>
    %81 = arith.mulf %78, %78 : vector<8x32xf32>
    %82 = arith.subf %80, %81 : vector<8x32xf32>
    %cst_43 = arith.constant 0.000000e+00 : f32
    %83 = vector.broadcast %cst_43 : f32 to vector<8x32xf32>
    %84 = arith.maximumf %82, %83 : vector<8x32xf32>
    %cst_44 = arith.constant 9.99999974E-6 : f32
    %85 = vector.broadcast %cst_44 : f32 to vector<8x32xf32>
    %86 = arith.addf %84, %85 : vector<8x32xf32>
    %87 = math.rsqrt %86 : vector<8x32xf32>
    %cst_45 = arith.constant dense<0.000000e+00> : vector<8x128xf32>
    %88 = tpu.matmul %87, %76, %cst_45 {dimension_numbers = #tpu.dot_dimension_numbers<[1], [0], [0], [1], [0, 0, 1, 1], [], []>} : vector<8x32xf32>, vector<32x128xf32>, vector<8x128xf32> -> vector<8x128xf32>
    %89 = arith.mulf %78, %87 : vector<8x32xf32>
    %cst_46 = arith.constant dense<0.000000e+00> : vector<8x128xf32>
    %90 = tpu.matmul %89, %76, %cst_46 {dimension_numbers = #tpu.dot_dimension_numbers<[1], [0], [0], [1], [0, 0, 1, 1], [], []>} : vector<8x32xf32>, vector<32x128xf32>, vector<8x128xf32> -> vector<8x128xf32>
    %91 = arith.mulf %71, %88 : vector<8x128xf32>
    %92 = vector.broadcast %77 : vector<1x128xf32> to vector<8x128xf32>
    %93 = arith.subf %92, %90 : vector<8x128xf32>
    %94 = arith.addf %91, %93 : vector<8x128xf32>
    %95 = arith.truncf %94 : vector<8x128xf32> to vector<8x128xbf16>
    %c3 = arith.constant 3 : index
    %c0_47 = arith.constant 0 : index
    %c0_48 = arith.constant 0 : index
    %96 = vector.load %arg7[%c3, %c0_47, %c0_48] : memref<6x128x128xbf16, #tpu.memory_space<vmem>>, vector<1x128x128xbf16>
    %97 = vector.shape_cast %96 : vector<1x128x128xbf16> to vector<128x128xbf16>
    %cst_49 = arith.constant dense<0.000000e+00> : vector<8x128xf32>
    %98 = tpu.matmul %95, %97, %cst_49 {dimension_numbers = #tpu.dot_dimension_numbers<[1], [0], [0], [1], [0, 0, 1, 1], [], []>} : vector<8x128xbf16>, vector<128x128xbf16>, vector<8x128xf32> -> vector<8x128xf32>
    %99 = vector.extract_strided_slice %73 {offsets = [1, 0], sizes = [1, 128], strides = [1, 1]} : vector<4x128xf32> to vector<1x128xf32>
    %100 = vector.broadcast %99 : vector<1x128xf32> to vector<8x128xf32>
    %101 = arith.addf %98, %100 : vector<8x128xf32>
    %102 = arith.negf %101 : vector<8x128xf32>
    %103 = math.exp %102 : vector<8x128xf32>
    %cst_50 = arith.constant 1.000000e+00 : f32
    %104 = vector.broadcast %cst_50 : f32 to vector<8x128xf32>
    %105 = arith.addf %104, %103 : vector<8x128xf32>
    %106 = arith.divf %104, %105 : vector<8x128xf32>
    %107 = arith.mulf %101, %106 : vector<8x128xf32>
    %108 = arith.truncf %107 : vector<8x128xf32> to vector<8x128xbf16>
    %c4 = arith.constant 4 : index
    %c0_51 = arith.constant 0 : index
    %c0_52 = arith.constant 0 : index
    %109 = vector.load %arg7[%c4, %c0_51, %c0_52] : memref<6x128x128xbf16, #tpu.memory_space<vmem>>, vector<1x128x128xbf16>
    %110 = vector.shape_cast %109 : vector<1x128x128xbf16> to vector<128x128xbf16>
    %cst_53 = arith.constant dense<0.000000e+00> : vector<8x128xf32>
    %111 = tpu.matmul %108, %110, %cst_53 {dimension_numbers = #tpu.dot_dimension_numbers<[1], [0], [0], [1], [0, 0, 1, 1], [], []>} : vector<8x128xbf16>, vector<128x128xbf16>, vector<8x128xf32> -> vector<8x128xf32>
    %112 = vector.extract_strided_slice %73 {offsets = [2, 0], sizes = [1, 128], strides = [1, 1]} : vector<4x128xf32> to vector<1x128xf32>
    %113 = vector.broadcast %112 : vector<1x128xf32> to vector<8x128xf32>
    %114 = arith.addf %111, %113 : vector<8x128xf32>
    %115 = arith.negf %114 : vector<8x128xf32>
    %116 = math.exp %115 : vector<8x128xf32>
    %cst_54 = arith.constant 1.000000e+00 : f32
    %117 = vector.broadcast %cst_54 : f32 to vector<8x128xf32>
    %118 = arith.addf %117, %116 : vector<8x128xf32>
    %119 = arith.divf %117, %118 : vector<8x128xf32>
    %120 = arith.mulf %114, %119 : vector<8x128xf32>
    %121 = arith.truncf %120 : vector<8x128xf32> to vector<8x128xbf16>
    %c5 = arith.constant 5 : index
    %c0_55 = arith.constant 0 : index
    %c0_56 = arith.constant 0 : index
    %122 = vector.load %arg7[%c5, %c0_55, %c0_56] : memref<6x128x128xbf16, #tpu.memory_space<vmem>>, vector<1x128x128xbf16>
    %123 = vector.shape_cast %122 : vector<1x128x128xbf16> to vector<128x128xbf16>
    %cst_57 = arith.constant dense<0.000000e+00> : vector<8x128xf32>
    %124 = tpu.matmul %121, %123, %cst_57 {dimension_numbers = #tpu.dot_dimension_numbers<[1], [0], [0], [1], [0, 0, 1, 1], [], []>} : vector<8x128xbf16>, vector<128x128xbf16>, vector<8x128xf32> -> vector<8x128xf32>
    %125 = vector.extract_strided_slice %73 {offsets = [3, 0], sizes = [1, 128], strides = [1, 1]} : vector<4x128xf32> to vector<1x128xf32>
    %126 = vector.broadcast %125 : vector<1x128xf32> to vector<8x128xf32>
    %127 = arith.addf %124, %126 : vector<8x128xf32>
    %128 = arith.negf %127 : vector<8x128xf32>
    %129 = math.exp %128 : vector<8x128xf32>
    %cst_58 = arith.constant 1.000000e+00 : f32
    %130 = vector.broadcast %cst_58 : f32 to vector<8x128xf32>
    %131 = arith.addf %130, %129 : vector<8x128xf32>
    %132 = arith.divf %130, %131 : vector<8x128xf32>
    %133 = arith.mulf %127, %132 : vector<8x128xf32>
    %134 = arith.addf %71, %133 : vector<8x128xf32>
    %cst_59 = arith.constant 0.707106769 : f32
    %135 = vector.broadcast %cst_59 : f32 to vector<8x128xf32>
    %136 = arith.mulf %134, %135 : vector<8x128xf32>
    %c0_60 = arith.constant 0 : index
    %c0_61 = arith.constant 0 : index
    %137 = vector.load %arg8[%c0_60, %c0_61] : memref<8x128xf32, #tpu.memory_space<vmem>>, vector<8x128xf32>
    tpu.vector_store %arg8[%c0_60, %c0_61], %136 {strides = array<i32>} : memref<8x128xf32, #tpu.memory_space<vmem>>, vector<8x128xf32>,
    return
  }
  func.func @transform_0(%arg0: i32) -> (i32, i32) {
    %c0_i32 = arith.constant 0 : i32
    %c0_i32_0 = arith.constant 0 : i32
    return %arg0, %c0_i32 : i32, i32
  }
  func.func @transform_1(%arg0: i32) -> (i32, i32) {
    %c0_i32 = arith.constant 0 : i32
    %c0_i32_0 = arith.constant 0 : i32
    %c0_i32_1 = arith.constant 0 : i32
    return %c0_i32, %c0_i32_0 : i32, i32
  }
  func.func @transform_2(%arg0: i32) -> (i32, i32) {
    %c0_i32 = arith.constant 0 : i32
    %c0_i32_0 = arith.constant 0 : i32
    %c0_i32_1 = arith.constant 0 : i32
    return %c0_i32, %c0_i32_0 : i32, i32
  }
  func.func @transform_3(%arg0: i32) -> (i32, i32) {
    %c0_i32 = arith.constant 0 : i32
    %c0_i32_0 = arith.constant 0 : i32
    %c0_i32_1 = arith.constant 0 : i32
    return %c0_i32, %c0_i32_0 : i32, i32
  }
  func.func @transform_4(%arg0: i32) -> (i32, i32, i32) {
    %c0_i32 = arith.constant 0 : i32
    %c0_i32_0 = arith.constant 0 : i32
    %c0_i32_1 = arith.constant 0 : i32
    %c0_i32_2 = arith.constant 0 : i32
    return %c0_i32, %c0_i32_0, %c0_i32_1 : i32, i32, i32
  }
  func.func @transform_5(%arg0: i32) -> (i32, i32, i32) {
    %c0_i32 = arith.constant 0 : i32
    %c0_i32_0 = arith.constant 0 : i32
    %c0_i32_1 = arith.constant 0 : i32
    %c0_i32_2 = arith.constant 0 : i32
    return %c0_i32, %c0_i32_0, %c0_i32_1 : i32, i32, i32
  }
  func.func @transform_6(%arg0: i32) -> (i32, i32, i32) {
    %c0_i32 = arith.constant 0 : i32
    %c0_i32_0 = arith.constant 0 : i32
    %c0_i32_1 = arith.constant 0 : i32
    %c0_i32_2 = arith.constant 0 : i32
    return %c0_i32, %c0_i32_0, %c0_i32_1 : i32, i32, i32
  }
  func.func @transform_7(%arg0: i32) -> (i32, i32) {
    %c0_i32 = arith.constant 0 : i32
    %c0_i32_0 = arith.constant 0 : i32
    return %arg0, %c0_i32 : i32, i32
  }
}

</mosaic_0001>

<llo_original>
// kernel: tpu_custom_call.1
$region0: #{tpu_custom_call.1}
  #allocation0 [shape = 'u32[]', space=smem, size = 0x4, offset = 0x4, fixed_abs, tag = 'smem constant byte address 0x4 - core index']
  #allocation1 [shape = 'u32[72,128]{1,0:T(1,128)}', space=vmem, size = 0x9000, scoped, tag = 'internal scratch']
  %s0 = inlined_call_operand.vmem [shape: f32[8,64], index: 0, kind: input, shape index: {}]
  %s1 = inlined_call_operand.vmem [shape: bf16[64,128], index: 1, kind: input, shape index: {}]
  %s2 = inlined_call_operand.vmem [shape: f32[1,128], index: 2, kind: input, shape index: {}]
  %s3 = inlined_call_operand.vmem [shape: f32[128,32], index: 3, kind: input, shape index: {}]
  %s4 = inlined_call_operand.vmem [shape: f32[2,32,128], index: 4, kind: input, shape index: {}]
  %s5 = inlined_call_operand.vmem [shape: f32[2,4,128], index: 5, kind: input, shape index: {}]
  %s6 = inlined_call_operand.hbm [shape: bf16[6,128,128], index: 6, kind: input, shape index: {}]
  %s7 = inlined_call_operand.hbm [shape: f32[8,128], index: 7, kind: output, shape index: {}]
  %s8 = sld [smem:[#allocation0]]
  $region42: #{tpu_custom_call.1} parent=0
    _
  %s10 = ssub.s32 1, %s8
  %s11 = scalar_select 0, %s10, %s8
  $region1: #{tpu_custom_call.1} parent=0
    #allocation2 [shape = 'u8[196608]{0}', space=vmem, size = 0x30000, scoped, tag = 'input window, operand 6, single buffered']
    #allocation3 [shape = 's32[1]{0}', space=sflag, size = 0x4, scoped, tag = 'scoped memory for tpu_custom_call.1']
    #allocation4 [shape = 's32[1]{0}', space=sflag, size = 0x4, scoped, tag = 'scoped memory for tpu_custom_call.1']
    #allocation5 [shape = 'u8[4096]{0}', space=vmem, size = 0x1000, scoped, tag = 'output window, operand 0, single buffered']
    %12 = vsyncpa [#allocation3], 0
    %13 = vsyncpa [#allocation4], 0
    // Predicated region
    $region2: #{tpu_custom_call.1} parent=1 // pred_check
      _
    $region3: #{tpu_custom_call.1} parent=1 // pred_check_branch
      %15 = sbr.rel (0) target = $region5
    $region4: #{tpu_custom_call.1} parent=1 // pred_region
      _
    $region5: #{tpu_custom_call.1} parent=1 // pred_fallthru
      _
    // Predicated region
    $region6: #{tpu_custom_call.1} parent=1 // pred_check
      _
    $region7: #{tpu_custom_call.1} parent=1 // pred_check_branch
      %17 = sbr.rel (0) target = $region9
    $region8: #{tpu_custom_call.1} parent=1 // pred_region
      _
    $region9: #{tpu_custom_call.1} parent=1 // pred_fallthru
      _
    // Predicated region
    $region10: #{tpu_custom_call.1} parent=1 // pred_check
      _
    $region11: #{tpu_custom_call.1} parent=1 // pred_check_branch
      %19 = sbr.rel (0) target = $region13
    $region12: #{tpu_custom_call.1} parent=1 // pred_region
      _
    $region13: #{tpu_custom_call.1} parent=1 // pred_fallthru
      _
    // Predicated region
    $region14: #{tpu_custom_call.1} parent=1 // pred_check
      _
    $region15: #{tpu_custom_call.1} parent=1 // pred_check_branch
      %21 = sbr.rel (0) target = $region17
    $region16: #{tpu_custom_call.1} parent=1 // pred_region
      _
    $region17: #{tpu_custom_call.1} parent=1 // pred_fallthru
      _
    // Predicated region
    $region18: #{tpu_custom_call.1} parent=1 // pred_check
      _
    $region19: #{tpu_custom_call.1} parent=1 // pred_check_branch
      %23 = sbr.rel (0) target = $region21
    $region20: #{tpu_custom_call.1} parent=1 // pred_region
      _
    $region21: #{tpu_custom_call.1} parent=1 // pred_fallthru
      _
    // Predicated region
    $region22: #{tpu_custom_call.1} parent=1 // pred_check
      _
    $region23: #{tpu_custom_call.1} parent=1 // pred_check_branch
      %25 = sbr.rel (0) target = $region25
    $region24: #{tpu_custom_call.1} parent=1 // pred_region
      _
    $region25: #{tpu_custom_call.1} parent=1 // pred_fallthru
      _
    // Predicated region
    $region26: #{tpu_custom_call.1} parent=1 // pred_check
      _
    $region27: #{tpu_custom_call.1} parent=1 // pred_check_branch
      %27 = sbr.rel (0) target = $region29
    $region28: #{tpu_custom_call.1} parent=1 // pred_region
      %29 = vsyncadd [#allocation3], 0
      %s30 = sshll.u32 %s6, 4
      %s31 = int_to_ptr.hbm [resolvable:$true] %s30
      %s32 = sshll.u32 [#allocation2], 4
      %s33 = int_to_ptr.vmem [resolvable:$true] %s32
      %38 = dma.hbm_to_vmem [thread:$0]  %s31, 6144, %s33, [#allocation3], 64, 64, 4
    $region29: #{tpu_custom_call.1} parent=1 // pred_fallthru
      _
    // Predicated region
    $region30: #{tpu_custom_call.1} parent=1 // pred_check
      _
    $region31: #{tpu_custom_call.1} parent=1 // pred_check_branch
      %40 = sbr.rel (0) target = $region33
    $region32: #{tpu_custom_call.1} parent=1 // pred_region
      %42 = dma.done [#allocation3], 6144
    $region33: #{tpu_custom_call.1} parent=1 // pred_fallthru
      _
    %v44 = vld [vmem:[%s0] sm:$0xff]
    %v45 = vpack.c.bf16 %v44, %v44
    %v46 = vld [vmem:[%s1] sm:$0xf]
    %v47 = vld [vmem:[%s1 + $0x4] sm:$0xf]
    %v48 = vld [vmem:[%s1 + $0x8] sm:$0xf]
    %v49 = vld [vmem:[%s1 + $0xc] sm:$0xf]
    %v50 = vld [vmem:[%s1 + $0x10] sm:$0xf]
    %v51 = vld [vmem:[%s1 + $0x14] sm:$0xf]
    %v52 = vld [vmem:[%s1 + $0x18] sm:$0xf]
    %v53 = vld [vmem:[%s1 + $0x1c] sm:$0xf]
    %v54 = vld [vmem:[%s2] sm:$0x1]
    %v56 = vperm.slane %v54, 0
    %v66 = vunpack.c.l.b16 %v46
    %v67 = vunpack.c.l.b16 %v47
    %v68 = vunpack.c.l.b16 %v48
    %v69 = vunpack.c.l.b16 %v49
    %v70 = vunpack.c.l.b16 %v50
    %v71 = vunpack.c.l.b16 %v51
    %v72 = vunpack.c.l.b16 %v52
    %v73 = vunpack.c.l.b16 %v53
    %v74 = vpack.c.b16 %v67, %v66
    %v75 = vpack.c.b16 %v69, %v68
    %v76 = vpack.c.b16 %v71, %v70
    %v77 = vpack.c.b16 %v73, %v72
    %vm82 = vcmask 523264
    %v84 = vsel %vm82, %v45, 0
    %86 = vmatpush.bf16.msra.mxu0 0
    %87 = vmatpush.bf16.msra.mxu0 0
    %88 = vmatpush.bf16.msra.mxu0 0
    %89 = vmatpush.bf16.msra.mxu0 0
    %90 = vmatpush.bf16.msra.mxu0 %v77
    %91 = vmatpush.bf16.msra.mxu0 %v76
    %92 = vmatpush.bf16.msra.mxu0 %v75
    %93 = vmatpush.bf16.msra.mxu0 %v74
    %94 = vmatmul.bf16.gmra.mxu0 %v84
    %v95 = vpop.f32.mrf.mxu0
    %v96 = vadd.f32 %v56, %v95
    %v97 = vpop.f32.mrf.mxu0
    %98 = vdwg.mxu0
    %v99 = vld [vmem:[%s5] sm:$0xf]
    %v100 = vld [vmem:[%s3] sm:$0xff]
    %v101 = vld [vmem:[%s3 + $0x8] sm:$0xff]
    %v102 = vld [vmem:[%s3 + $0x10] sm:$0xff]
    %v103 = vld [vmem:[%s3 + $0x18] sm:$0xff]
    %v104 = vld [vmem:[%s3 + $0x20] sm:$0xff]
    %v105 = vld [vmem:[%s3 + $0x28] sm:$0xff]
    %v106 = vld [vmem:[%s3 + $0x30] sm:$0xff]
    %v107 = vld [vmem:[%s3 + $0x38] sm:$0xff]
    %v108 = vld [vmem:[%s3 + $0x40] sm:$0xff]
    %v109 = vld [vmem:[%s3 + $0x48] sm:$0xff]
    %v110 = vld [vmem:[%s3 + $0x50] sm:$0xff]
    %v111 = vld [vmem:[%s3 + $0x58] sm:$0xff]
    %v112 = vld [vmem:[%s3 + $0x60] sm:$0xff]
    %v113 = vld [vmem:[%s3 + $0x68] sm:$0xff]
    %v114 = vld [vmem:[%s3 + $0x70] sm:$0xff]
    %v115 = vld [vmem:[%s3 + $0x78] sm:$0xff]
    %v116 = vld [vmem:[%s4] sm:$0xff]
    %v117 = vld [vmem:[%s4 + $0x8] sm:$0xff]
    %v118 = vld [vmem:[%s4 + $0x10] sm:$0xff]
    %v119 = vld [vmem:[%s4 + $0x18] sm:$0xff]
    %120 = vmatpush.msra.mxu0 %v115
    %121 = vmatpush.msra.mxu0 %v114
    %122 = vmatpush.msra.mxu0 %v113
    %123 = vmatpush.msra.mxu0 %v112
    %124 = vmatpush.msra.mxu0 %v111
    %125 = vmatpush.msra.mxu0 %v110
    %126 = vmatpush.msra.mxu0 %v109
    %127 = vmatpush.msra.mxu0 %v108
    %128 = vmatpush.msra.mxu0 %v107
    %129 = vmatpush.msra.mxu0 %v106
    %130 = vmatpush.msra.mxu0 %v105
    %131 = vmatpush.msra.mxu0 %v104
    %132 = vmatpush.msra.mxu0 %v103
    %133 = vmatpush.msra.mxu0 %v102
    %134 = vmatpush.msra.mxu0 %v101
    %135 = vmatpush.msra.mxu0 %v100
    %136 = vmatmul.f32.gmra.mxu0 %v96
    %v137 = vpop.f32.mrf.mxu0
    %v138 = vadd.f32 0.0, %v137
    %139 = vdwg.mxu0
    %v140 = vmul.f32 %v96, %v96
    %141 = vmatpush.msra.mxu0 %v115
    %142 = vmatpush.msra.mxu0 %v114
    %143 = vmatpush.msra.mxu0 %v113
    %144 = vmatpush.msra.mxu0 %v112
    %145 = vmatpush.msra.mxu0 %v111
    %146 = vmatpush.msra.mxu0 %v110
    %147 = vmatpush.msra.mxu0 %v109
    %148 = vmatpush.msra.mxu0 %v108
    %149 = vmatpush.msra.mxu0 %v107
    %150 = vmatpush.msra.mxu0 %v106
    %151 = vmatpush.msra.mxu0 %v105
    %152 = vmatpush.msra.mxu0 %v104
    %153 = vmatpush.msra.mxu0 %v103
    %154 = vmatpush.msra.mxu0 %v102
    %155 = vmatpush.msra.mxu0 %v101
    %156 = vmatpush.msra.mxu0 %v100
    %157 = vmatmul.f32.gmra.mxu0 %v140
    %v158 = vpop.f32.mrf.mxu0
    %v159 = vadd.f32 0.0, %v158
    %160 = vdwg.mxu0
    %v161 = vmul.f32 %v138, %v138
    %v162 = vsub.f32 %v159, %v161
    %v163 = vmax.f32 %v162, 0.0
    %v164 = vadd.f32 %v163, 1e-05
    %v165 = vrsqrt.pop %v164
    %v166 = vmul.f32 %v165, %v164
    %v167 = vmul.f32 %v166, %v165
    %v168 = vmul.f32 0.5, %v167
    %v169 = vsub.f32 1.5, %v168
    %v170 = vmul.f32 %v165, %v169
    %vm171 = vweird.f32 %v164
    %vm172 = vweird.f32 %v165
    %vm173 = vmor %vm171, %vm172
    %v174 = vsel %vm173, %v165, %v170
    %vm175 = vcmask 261120
    %v177 = vsel %vm175, %v174, 0
    %179 = vmatpush.msra.mxu0 0.0
    %180 = vmatpush.msra.mxu0 0.0
    %181 = vmatpush.msra.mxu0 0.0
    %182 = vmatpush.msra.mxu0 0.0
    %183 = vmatpush.msra.mxu0 0.0
    %184 = vmatpush.msra.mxu0 0.0
    %185 = vmatpush.msra.mxu0 0.0
    %186 = vmatpush.msra.mxu0 0.0
    %187 = vmatpush.msra.mxu0 0.0
    %188 = vmatpush.msra.mxu0 0.0
    %189 = vmatpush.msra.mxu0 0.0
    %190 = vmatpush.msra.mxu0 0.0
    %191 = vmatpush.msra.mxu0 %v119
    %192 = vmatpush.msra.mxu0 %v118
    %193 = vmatpush.msra.mxu0 %v117
    %194 = vmatpush.msra.mxu0 %v116
    %195 = vmatmul.f32.gmra.mxu0 %v177
    %v196 = vpop.f32.mrf.mxu0
    %v197 = vadd.f32 0.0, %v196
    %198 = vdwg.mxu0
    %v199 = vmul.f32 %v138, %v174
    %v201 = vsel %vm175, %v199, 0
    %203 = vmatpush.msra.mxu0 0.0
    %204 = vmatpush.msra.mxu0 0.0
    %205 = vmatpush.msra.mxu0 0.0
    %206 = vmatpush.msra.mxu0 0.0
    %207 = vmatpush.msra.mxu0 0.0
    %208 = vmatpush.msra.mxu0 0.0
    %209 = vmatpush.msra.mxu0 0.0
    %210 = vmatpush.msra.mxu0 0.0
    %211 = vmatpush.msra.mxu0 0.0
    %212 = vmatpush.msra.mxu0 0.0
    %213 = vmatpush.msra.mxu0 0.0
    %214 = vmatpush.msra.mxu0 0.0
    %215 = vmatpush.msra.mxu0 %v119
    %216 = vmatpush.msra.mxu0 %v118
    %217 = vmatpush.msra.mxu0 %v117
    %218 = vmatpush.msra.mxu0 %v116
    %219 = vmatmul.f32.gmra.mxu0 %v201
    %v220 = vpop.f32.mrf.mxu0
    %v221 = vadd.f32 0.0, %v220
    %222 = vdwg.mxu0
    %v223 = vmul.f32 %v96, %v197
    %v224 = vperm.slane %v99, 0
    %v225 = vsub.f32 %v224, %v221
    %v226 = vadd.f32 %v223, %v225
    %v227 = vpack.c.bf16 %v226, %v226
    %v228 = vld [vmem:[#allocation2] sm:$0xf]
    %v229 = vld [vmem:[#allocation2 + $0x4] sm:$0xf]
    %v230 = vld [vmem:[#allocation2 + $0x8] sm:$0xf]
    %v231 = vld [vmem:[#allocation2 + $0xc] sm:$0xf]
    %v232 = vld [vmem:[#allocation2 + $0x10] sm:$0xf]
    %v233 = vld [vmem:[#allocation2 + $0x14] sm:$0xf]
    %v234 = vld [vmem:[#allocation2 + $0x18] sm:$0xf]
    %v235 = vld [vmem:[#allocation2 + $0x1c] sm:$0xf]
    %v236 = vld [vmem:[#allocation2 + $0x20] sm:$0xf]
    %v237 = vld [vmem:[#allocation2 + $0x24] sm:$0xf]
    %v238 = vld [vmem:[#allocation2 + $0x28] sm:$0xf]
    %v239 = vld [vmem:[#allocation2 + $0x2c] sm:$0xf]
    %v240 = vld [vmem:[#allocation2 + $0x30] sm:$0xf]
    %v241 = vld [vmem:[#allocation2 + $0x34] sm:$0xf]
    %v242 = vld [vmem:[#allocation2 + $0x38] sm:$0xf]
    %v243 = vld [vmem:[#allocation2 + $0x3c] sm:$0xf]
    %v244 = vperm.slane %v99, 1
    %v261 = vunpack.c.l.b16 %v228
    %v262 = vunpack.c.l.b16 %v229
    %v263 = vunpack.c.l.b16 %v230
    %v264 = vunpack.c.l.b16 %v231
    %v265 = vunpack.c.l.b16 %v232
    %v266 = vunpack.c.l.b16 %v233
    %v267 = vunpack.c.l.b16 %v234
    %v268 = vunpack.c.l.b16 %v235
    %v269 = vunpack.c.l.b16 %v236
    %v270 = vunpack.c.l.b16 %v237
    %v271 = vunpack.c.l.b16 %v238
    %v272 = vunpack.c.l.b16 %v239
    %v273 = vunpack.c.l.b16 %v240
    %v274 = vunpack.c.l.b16 %v241
    %v275 = vunpack.c.l.b16 %v242
    %v276 = vunpack.c.l.b16 %v243
    %v277 = vpack.c.b16 %v262, %v261
    %v278 = vpack.c.b16 %v264, %v263
    %v279 = vpack.c.b16 %v266, %v265
    %v280 = vpack.c.b16 %v268, %v267
    %v281 = vpack.c.b16 %v270, %v269
    %v282 = vpack.c.b16 %v272, %v271
    %v283 = vpack.c.b16 %v274, %v273
    %v284 = vpack.c.b16 %v276, %v275
    %293 = vmatpush.bf16.msra.mxu0 %v284
    %294 = vmatpush.bf16.msra.mxu0 %v283
    %295 = vmatpush.bf16.msra.mxu0 %v282
    %296 = vmatpush.bf16.msra.mxu0 %v281
    %297 = vmatpush.bf16.msra.mxu0 %v280
    %298 = vmatpush.bf16.msra.mxu0 %v279
    %299 = vmatpush.bf16.msra.mxu0 %v278
    %300 = vmatpush.bf16.msra.mxu0 %v277
    %301 = vmatmul.bf16.gmra.mxu0 %v227
    %v302 = vpop.f32.mrf.mxu0
    %v303 = vadd.f32 %v244, %v302
    %v304 = vpop.f32.mrf.mxu0
    %305 = vdwg.mxu0
    %v306 = vxor.u32 %v303, 2147483648
    %v307 = vmul.f32 %v306, 1.442695
    %v308 = vpow.pop %v307
    %v309 = vadd.f32 %v308, 1.0
    %v310 = vrcp.pop %v309
    %v311 = vmul.f32 %v309, %v310
    %v312 = vsub.f32 1.0, %v311
    %v313 = vmul.f32 %v310, %v312
    %v314 = vadd.f32 %v310, %v313
    %vm315 = vweird.f32 %v309
    %vm316 = vweird.f32 %v310
    %vm317 = vmor %vm315, %vm316
    %v318 = vsel %vm317, %v310, %v314
    %v319 = vand.u32 2147483647, %v309
    %vm320 = vcmp.eq.f32.partialorder %v319, 8.507059e+37
    %v321 = vand.u32 %v309, 2147483648
    %v322 = vor.u32 1.1754944e-38, %v321
    %v323 = vsel %vm320, %v322, %v318
    %v324 = vmul.f32 1.0, %v323
    %v325 = vmul.f32 %v303, %v324
    %v326 = vpack.c.bf16 %v325, %v325
    %s327 = scalar_lea.vmem [#allocation2], 64
    %v328 = vld [vmem:[%s327] sm:$0xf]
    %v329 = vld [vmem:[%s327 + $0x4] sm:$0xf]
    %v330 = vld [vmem:[%s327 + $0x8] sm:$0xf]
    %v331 = vld [vmem:[%s327 + $0xc] sm:$0xf]
    %v332 = vld [vmem:[%s327 + $0x10] sm:$0xf]
    %v333 = vld [vmem:[%s327 + $0x14] sm:$0xf]
    %v334 = vld [vmem:[%s327 + $0x18] sm:$0xf]
    %v335 = vld [vmem:[%s327 + $0x1c] sm:$0xf]
    %v336 = vld [vmem:[%s327 + $0x20] sm:$0xf]
    %v337 = vld [vmem:[%s327 + $0x24] sm:$0xf]
    %v338 = vld [vmem:[%s327 + $0x28] sm:$0xf]
    %v339 = vld [vmem:[%s327 + $0x2c] sm:$0xf]
    %v340 = vld [vmem:[%s327 + $0x30] sm:$0xf]
    %v341 = vld [vmem:[%s327 + $0x34] sm:$0xf]
    %v342 = vld [vmem:[%s327 + $0x38] sm:$0xf]
    %v343 = vld [vmem:[%s327 + $0x3c] sm:$0xf]
    %v344 = vperm.slane %v99, 2
    %v361 = vunpack.c.l.b16 %v328
    %v362 = vunpack.c.l.b16 %v329
    %v363 = vunpack.c.l.b16 %v330
    %v364 = vunpack.c.l.b16 %v331
    %v365 = vunpack.c.l.b16 %v332
    %v366 = vunpack.c.l.b16 %v333
    %v367 = vunpack.c.l.b16 %v334
    %v368 = vunpack.c.l.b16 %v335
    %v369 = vunpack.c.l.b16 %v336
    %v370 = vunpack.c.l.b16 %v337
    %v371 = vunpack.c.l.b16 %v338
    %v372 = vunpack.c.l.b16 %v339
    %v373 = vunpack.c.l.b16 %v340
    %v374 = vunpack.c.l.b16 %v341
    %v375 = vunpack.c.l.b16 %v342
    %v376 = vunpack.c.l.b16 %v343
    %v377 = vpack.c.b16 %v362, %v361
    %v378 = vpack.c.b16 %v364, %v363
    %v379 = vpack.c.b16 %v366, %v365
    %v380 = vpack.c.b16 %v368, %v367
    %v381 = vpack.c.b16 %v370, %v369
    %v382 = vpack.c.b16 %v372, %v371
    %v383 = vpack.c.b16 %v374, %v373
    %v384 = vpack.c.b16 %v376, %v375
    %393 = vmatpush.bf16.msra.mxu0 %v384
    %394 = vmatpush.bf16.msra.mxu0 %v383
    %395 = vmatpush.bf16.msra.mxu0 %v382
    %396 = vmatpush.bf16.msra.mxu0 %v381
    %397 = vmatpush.bf16.msra.mxu0 %v380
    %398 = vmatpush.bf16.msra.mxu0 %v379
    %399 = vmatpush.bf16.msra.mxu0 %v378
    %400 = vmatpush.bf16.msra.mxu0 %v377
    %401 = vmatmul.bf16.gmra.mxu0 %v326
    %v402 = vpop.f32.mrf.mxu0
    %v403 = vadd.f32 %v344, %v402
    %v404 = vpop.f32.mrf.mxu0
    %405 = vdwg.mxu0
    %v406 = vxor.u32 %v403, 2147483648
    %v407 = vmul.f32 %v406, 1.442695
    %v408 = vpow.pop %v407
    %v409 = vadd.f32 %v408, 1.0
    %v410 = vrcp.pop %v409
    %v411 = vmul.f32 %v409, %v410
    %v412 = vsub.f32 1.0, %v411
    %v413 = vmul.f32 %v410, %v412
    %v414 = vadd.f32 %v410, %v413
    %vm415 = vweird.f32 %v409
    %vm416 = vweird.f32 %v410
    %vm417 = vmor %vm415, %vm416
    %v418 = vsel %vm417, %v410, %v414
    %v419 = vand.u32 2147483647, %v409
    %vm420 = vcmp.eq.f32.partialorder %v419, 8.507059e+37
    %v421 = vand.u32 %v409, 2147483648
    %v422 = vor.u32 1.1754944e-38, %v421
    %v423 = vsel %vm420, %v422, %v418
    %v424 = vmul.f32 1.0, %v423
    %v425 = vmul.f32 %v403, %v424
    %v426 = vpack.c.bf16 %v425, %v425
    %s427 = scalar_lea.vmem [#allocation2], 128
    %v428 = vld [vmem:[%s427] sm:$0xf]
    %v429 = vld [vmem:[%s427 + $0x4] sm:$0xf]
    %v430 = vld [vmem:[%s427 + $0x8] sm:$0xf]
    %v431 = vld [vmem:[%s427 + $0xc] sm:$0xf]
    %v432 = vld [vmem:[%s427 + $0x10] sm:$0xf]
    %v433 = vld [vmem:[%s427 + $0x14] sm:$0xf]
    %v434 = vld [vmem:[%s427 + $0x18] sm:$0xf]
    %v435 = vld [vmem:[%s427 + $0x1c] sm:$0xf]
    %v436 = vld [vmem:[%s427 + $0x20] sm:$0xf]
    %v437 = vld [vmem:[%s427 + $0x24] sm:$0xf]
    %v438 = vld [vmem:[%s427 + $0x28] sm:$0xf]
    %v439 = vld [vmem:[%s427 + $0x2c] sm:$0xf]
    %v440 = vld [vmem:[%s427 + $0x30] sm:$0xf]
    %v441 = vld [vmem:[%s427 + $0x34] sm:$0xf]
    %v442 = vld [vmem:[%s427 + $0x38] sm:$0xf]
    %v443 = vld [vmem:[%s427 + $0x3c] sm:$0xf]
    %v444 = vperm.slane %v99, 3
    %v461 = vunpack.c.l.b16 %v428
    %v462 = vunpack.c.l.b16 %v429
    %v463 = vunpack.c.l.b16 %v430
    %v464 = vunpack.c.l.b16 %v431
    %v465 = vunpack.c.l.b16 %v432
    %v466 = vunpack.c.l.b16 %v433
    %v467 = vunpack.c.l.b16 %v434
    %v468 = vunpack.c.l.b16 %v435
    %v469 = vunpack.c.l.b16 %v436
    %v470 = vunpack.c.l.b16 %v437
    %v471 = vunpack.c.l.b16 %v438
    %v472 = vunpack.c.l.b16 %v439
    %v473 = vunpack.c.l.b16 %v440
    %v474 = vunpack.c.l.b16 %v441
    %v475 = vunpack.c.l.b16 %v442
    %v476 = vunpack.c.l.b16 %v443
    %v477 = vpack.c.b16 %v462, %v461
    %v478 = vpack.c.b16 %v464, %v463
    %v479 = vpack.c.b16 %v466, %v465
    %v480 = vpack.c.b16 %v468, %v467
    %v481 = vpack.c.b16 %v470, %v469
    %v482 = vpack.c.b16 %v472, %v471
    %v483 = vpack.c.b16 %v474, %v473
    %v484 = vpack.c.b16 %v476, %v475
    %493 = vmatpush.bf16.msra.mxu0 %v484
    %494 = vmatpush.bf16.msra.mxu0 %v483
    %495 = vmatpush.bf16.msra.mxu0 %v482
    %496 = vmatpush.bf16.msra.mxu0 %v481
    %497 = vmatpush.bf16.msra.mxu0 %v480
    %498 = vmatpush.bf16.msra.mxu0 %v479
    %499 = vmatpush.bf16.msra.mxu0 %v478
    %500 = vmatpush.bf16.msra.mxu0 %v477
    %501 = vmatmul.bf16.gmra.mxu0 %v426
    %v502 = vpop.f32.mrf.mxu0
    %v503 = vadd.f32 %v444, %v502
    %v504 = vpop.f32.mrf.mxu0
    %505 = vdwg.mxu0
    %v506 = vxor.u32 %v503, 2147483648
    %v507 = vmul.f32 %v506, 1.442695
    %v508 = vpow.pop %v507
    %v509 = vadd.f32 %v508, 1.0
    %v510 = vrcp.pop %v509
    %v511 = vmul.f32 %v509, %v510
    %v512 = vsub.f32 1.0, %v511
    %v513 = vmul.f32 %v510, %v512
    %v514 = vadd.f32 %v510, %v513
    %vm515 = vweird.f32 %v509
    %vm516 = vweird.f32 %v510
    %vm517 = vmor %vm515, %vm516
    %v518 = vsel %vm517, %v510, %v514
    %v519 = vand.u32 2147483647, %v509
    %vm520 = vcmp.eq.f32.partialorder %v519, 8.507059e+37
    %v521 = vand.u32 %v509, 2147483648
    %v522 = vor.u32 1.1754944e-38, %v521
    %v523 = vsel %vm520, %v522, %v518
    %v524 = vmul.f32 1.0, %v523
    %v525 = vmul.f32 %v503, %v524
    %v526 = vadd.f32 %v96, %v525
    %v527 = vmul.f32 %v526, 0.70710677
    %s528 = scalar_lea.vmem %s5, 4
    %v529 = vld [vmem:[%s528] sm:$0xf]
    %s530 = scalar_lea.vmem %s4, 32
    %v531 = vld [vmem:[%s530] sm:$0xff]
    %v532 = vld [vmem:[%s530 + $0x8] sm:$0xff]
    %v533 = vld [vmem:[%s530 + $0x10] sm:$0xff]
    %v534 = vld [vmem:[%s530 + $0x18] sm:$0xff]
    %535 = vmatpush.msra.mxu0 %v115
    %536 = vmatpush.msra.mxu0 %v114
    %537 = vmatpush.msra.mxu0 %v113
    %538 = vmatpush.msra.mxu0 %v112
    %539 = vmatpush.msra.mxu0 %v111
    %540 = vmatpush.msra.mxu0 %v110
    %541 = vmatpush.msra.mxu0 %v109
    %542 = vmatpush.msra.mxu0 %v108
    %543 = vmatpush.msra.mxu0 %v107
    %544 = vmatpush.msra.mxu0 %v106
    %545 = vmatpush.msra.mxu0 %v105
    %546 = vmatpush.msra.mxu0 %v104
    %547 = vmatpush.msra.mxu0 %v103
    %548 = vmatpush.msra.mxu0 %v102
    %549 = vmatpush.msra.mxu0 %v101
    %550 = vmatpush.msra.mxu0 %v100
    %551 = vmatmul.f32.gmra.mxu0 %v527
    %v552 = vpop.f32.mrf.mxu0
    %v553 = vadd.f32 0.0, %v552
    %554 = vdwg.mxu0
    %v555 = vmul.f32 %v527, %v527
    %556 = vmatpush.msra.mxu0 %v115
    %557 = vmatpush.msra.mxu0 %v114
    %558 = vmatpush.msra.mxu0 %v113
    %559 = vmatpush.msra.mxu0 %v112
    %560 = vmatpush.msra.mxu0 %v111
    %561 = vmatpush.msra.mxu0 %v110
    %562 = vmatpush.msra.mxu0 %v109
    %563 = vmatpush.msra.mxu0 %v108
    %564 = vmatpush.msra.mxu0 %v107
    %565 = vmatpush.msra.mxu0 %v106
    %566 = vmatpush.msra.mxu0 %v105
    %567 = vmatpush.msra.mxu0 %v104
    %568 = vmatpush.msra.mxu0 %v103
    %569 = vmatpush.msra.mxu0 %v102
    %570 = vmatpush.msra.mxu0 %v101
    %571 = vmatpush.msra.mxu0 %v100
    %572 = vmatmul.f32.gmra.mxu0 %v555
    %v573 = vpop.f32.mrf.mxu0
    %v574 = vadd.f32 0.0, %v573
    %575 = vdwg.mxu0
    %v576 = vmul.f32 %v553, %v553
    %v577 = vsub.f32 %v574, %v576
    %v578 = vmax.f32 %v577, 0.0
    %v579 = vadd.f32 %v578, 1e-05
    %v580 = vrsqrt.pop %v579
    %v581 = vmul.f32 %v580, %v579
    %v582 = vmul.f32 %v581, %v580
    %v583 = vmul.f32 0.5, %v582
    %v584 = vsub.f32 1.5, %v583
    %v585 = vmul.f32 %v580, %v584
    %vm586 = vweird.f32 %v579
    %vm587 = vweird.f32 %v580
    %vm588 = vmor %vm586, %vm587
    %v589 = vsel %vm588, %v580, %v585
    %v591 = vsel %vm175, %v589, 0
    %593 = vmatpush.msra.mxu0 0.0
    %594 = vmatpush.msra.mxu0 0.0
    %595 = vmatpush.msra.mxu0 0.0
    %596 = vmatpush.msra.mxu0 0.0
    %597 = vmatpush.msra.mxu0 0.0
    %598 = vmatpush.msra.mxu0 0.0
    %599 = vmatpush.msra.mxu0 0.0
    %600 = vmatpush.msra.mxu0 0.0
    %601 = vmatpush.msra.mxu0 0.0
    %602 = vmatpush.msra.mxu0 0.0
    %603 = vmatpush.msra.mxu0 0.0
    %604 = vmatpush.msra.mxu0 0.0
    %605 = vmatpush.msra.mxu0 %v534
    %606 = vmatpush.msra.mxu0 %v533
    %607 = vmatpush.msra.mxu0 %v532
    %608 = vmatpush.msra.mxu0 %v531
    %609 = vmatmul.f32.gmra.mxu0 %v591
    %v610 = vpop.f32.mrf.mxu0
    %v611 = vadd.f32 0.0, %v610
    %612 = vdwg.mxu0
    %v613 = vmul.f32 %v553, %v589
    %v615 = vsel %vm175, %v613, 0
    %617 = vmatpush.msra.mxu0 0.0
    %618 = vmatpush.msra.mxu0 0.0
    %619 = vmatpush.msra.mxu0 0.0
    %620 = vmatpush.msra.mxu0 0.0
    %621 = vmatpush.msra.mxu0 0.0
    %622 = vmatpush.msra.mxu0 0.0
    %623 = vmatpush.msra.mxu0 0.0
    %624 = vmatpush.msra.mxu0 0.0
    %625 = vmatpush.msra.mxu0 0.0
    %626 = vmatpush.msra.mxu0 0.0
    %627 = vmatpush.msra.mxu0 0.0
    %628 = vmatpush.msra.mxu0 0.0
    %629 = vmatpush.msra.mxu0 %v534
    %630 = vmatpush.msra.mxu0 %v533
    %631 = vmatpush.msra.mxu0 %v532
    %632 = vmatpush.msra.mxu0 %v531
    %633 = vmatmul.f32.gmra.mxu0 %v615
    %v634 = vpop.f32.mrf.mxu0
    %v635 = vadd.f32 0.0, %v634
    %636 = vdwg.mxu0
    %v637 = vmul.f32 %v527, %v611
    %v638 = vperm.slane %v529, 0
    %v639 = vsub.f32 %v638, %v635
    %v640 = vadd.f32 %v637, %v639
    %v641 = vpack.c.bf16 %v640, %v640
    %s642 = scalar_lea.vmem [#allocation2], 192
    %v643 = vld [vmem:[%s642] sm:$0xf]
    %v644 = vld [vmem:[%s642 + $0x4] sm:$0xf]
    %v645 = vld [vmem:[%s642 + $0x8] sm:$0xf]
    %v646 = vld [vmem:[%s642 + $0xc] sm:$0xf]
    %v647 = vld [vmem:[%s642 + $0x10] sm:$0xf]
    %v648 = vld [vmem:[%s642 + $0x14] sm:$0xf]
    %v649 = vld [vmem:[%s642 + $0x18] sm:$0xf]
    %v650 = vld [vmem:[%s642 + $0x1c] sm:$0xf]
    %v651 = vld [vmem:[%s642 + $0x20] sm:$0xf]
    %v652 = vld [vmem:[%s642 + $0x24] sm:$0xf]
    %v653 = vld [vmem:[%s642 + $0x28] sm:$0xf]
    %v654 = vld [vmem:[%s642 + $0x2c] sm:$0xf]
    %v655 = vld [vmem:[%s642 + $0x30] sm:$0xf]
    %v656 = vld [vmem:[%s642 + $0x34] sm:$0xf]
    %v657 = vld [vmem:[%s642 + $0x38] sm:$0xf]
    %v658 = vld [vmem:[%s642 + $0x3c] sm:$0xf]
    %v659 = vperm.slane %v529, 1
    %v676 = vunpack.c.l.b16 %v643
    %v677 = vunpack.c.l.b16 %v644
    %v678 = vunpack.c.l.b16 %v645
    %v679 = vunpack.c.l.b16 %v646
    %v680 = vunpack.c.l.b16 %v647
    %v681 = vunpack.c.l.b16 %v648
    %v682 = vunpack.c.l.b16 %v649
    %v683 = vunpack.c.l.b16 %v650
    %v684 = vunpack.c.l.b16 %v651
    %v685 = vunpack.c.l.b16 %v652
    %v686 = vunpack.c.l.b16 %v653
    %v687 = vunpack.c.l.b16 %v654
    %v688 = vunpack.c.l.b16 %v655
    %v689 = vunpack.c.l.b16 %v656
    %v690 = vunpack.c.l.b16 %v657
    %v691 = vunpack.c.l.b16 %v658
    %v692 = vpack.c.b16 %v677, %v676
    %v693 = vpack.c.b16 %v679, %v678
    %v694 = vpack.c.b16 %v681, %v680
    %v695 = vpack.c.b16 %v683, %v682
    %v696 = vpack.c.b16 %v685, %v684
    %v697 = vpack.c.b16 %v687, %v686
    %v698 = vpack.c.b16 %v689, %v688
    %v699 = vpack.c.b16 %v691, %v690
    %708 = vmatpush.bf16.msra.mxu0 %v699
    %709 = vmatpush.bf16.msra.mxu0 %v698
    %710 = vmatpush.bf16.msra.mxu0 %v697
    %711 = vmatpush.bf16.msra.mxu0 %v696
    %712 = vmatpush.bf16.msra.mxu0 %v695
    %713 = vmatpush.bf16.msra.mxu0 %v694
    %714 = vmatpush.bf16.msra.mxu0 %v693
    %715 = vmatpush.bf16.msra.mxu0 %v692
    %716 = vmatmul.bf16.gmra.mxu0 %v641
    %v717 = vpop.f32.mrf.mxu0
    %v718 = vadd.f32 %v659, %v717
    %v719 = vpop.f32.mrf.mxu0
    %720 = vdwg.mxu0
    %v721 = vxor.u32 %v718, 2147483648
    %v722 = vmul.f32 %v721, 1.442695
    %v723 = vpow.pop %v722
    %v724 = vadd.f32 %v723, 1.0
    %v725 = vrcp.pop %v724
    %v726 = vmul.f32 %v724, %v725
    %v727 = vsub.f32 1.0, %v726
    %v728 = vmul.f32 %v725, %v727
    %v729 = vadd.f32 %v725, %v728
    %vm730 = vweird.f32 %v724
    %vm731 = vweird.f32 %v725
    %vm732 = vmor %vm730, %vm731
    %v733 = vsel %vm732, %v725, %v729
    %v734 = vand.u32 2147483647, %v724
    %vm735 = vcmp.eq.f32.partialorder %v734, 8.507059e+37
    %v736 = vand.u32 %v724, 2147483648
    %v737 = vor.u32 1.1754944e-38, %v736
    %v738 = vsel %vm735, %v737, %v733
    %v739 = vmul.f32 1.0, %v738
    %v740 = vmul.f32 %v718, %v739
    %v741 = vpack.c.bf16 %v740, %v740
    %s742 = scalar_lea.vmem [#allocation2], 256
    %v743 = vld [vmem:[%s742] sm:$0xf]
    %v744 = vld [vmem:[%s742 + $0x4] sm:$0xf]
    %v745 = vld [vmem:[%s742 + $0x8] sm:$0xf]
    %v746 = vld [vmem:[%s742 + $0xc] sm:$0xf]
    %v747 = vld [vmem:[%s742 + $0x10] sm:$0xf]
    %v748 = vld [vmem:[%s742 + $0x14] sm:$0xf]
    %v749 = vld [vmem:[%s742 + $0x18] sm:$0xf]
    %v750 = vld [vmem:[%s742 + $0x1c] sm:$0xf]
    %v751 = vld [vmem:[%s742 + $0x20] sm:$0xf]
    %v752 = vld [vmem:[%s742 + $0x24] sm:$0xf]
    %v753 = vld [vmem:[%s742 + $0x28] sm:$0xf]
    %v754 = vld [vmem:[%s742 + $0x2c] sm:$0xf]
    %v755 = vld [vmem:[%s742 + $0x30] sm:$0xf]
    %v756 = vld [vmem:[%s742 + $0x34] sm:$0xf]
    %v757 = vld [vmem:[%s742 + $0x38] sm:$0xf]
    %v758 = vld [vmem:[%s742 + $0x3c] sm:$0xf]
    %v759 = vperm.slane %v529, 2
    %v776 = vunpack.c.l.b16 %v743
    %v777 = vunpack.c.l.b16 %v744
    %v778 = vunpack.c.l.b16 %v745
    %v779 = vunpack.c.l.b16 %v746
    %v780 = vunpack.c.l.b16 %v747
    %v781 = vunpack.c.l.b16 %v748
    %v782 = vunpack.c.l.b16 %v749
    %v783 = vunpack.c.l.b16 %v750
    %v784 = vunpack.c.l.b16 %v751
    %v785 = vunpack.c.l.b16 %v752
    %v786 = vunpack.c.l.b16 %v753
    %v787 = vunpack.c.l.b16 %v754
    %v788 = vunpack.c.l.b16 %v755
    %v789 = vunpack.c.l.b16 %v756
    %v790 = vunpack.c.l.b16 %v757
    %v791 = vunpack.c.l.b16 %v758
    %v792 = vpack.c.b16 %v777, %v776
    %v793 = vpack.c.b16 %v779, %v778
    %v794 = vpack.c.b16 %v781, %v780
    %v795 = vpack.c.b16 %v783, %v782
    %v796 = vpack.c.b16 %v785, %v784
    %v797 = vpack.c.b16 %v787, %v786
    %v798 = vpack.c.b16 %v789, %v788
    %v799 = vpack.c.b16 %v791, %v790
    %808 = vmatpush.bf16.msra.mxu0 %v799
    %809 = vmatpush.bf16.msra.mxu0 %v798
    %810 = vmatpush.bf16.msra.mxu0 %v797
    %811 = vmatpush.bf16.msra.mxu0 %v796
    %812 = vmatpush.bf16.msra.mxu0 %v795
    %813 = vmatpush.bf16.msra.mxu0 %v794
    %814 = vmatpush.bf16.msra.mxu0 %v793
    %815 = vmatpush.bf16.msra.mxu0 %v792
    %816 = vmatmul.bf16.gmra.mxu0 %v741
    %v817 = vpop.f32.mrf.mxu0
    %v818 = vadd.f32 %v759, %v817
    %v819 = vpop.f32.mrf.mxu0
    %820 = vdwg.mxu0
    %v821 = vxor.u32 %v818, 2147483648
    %v822 = vmul.f32 %v821, 1.442695
    %v823 = vpow.pop %v822
    %v824 = vadd.f32 %v823, 1.0
    %v825 = vrcp.pop %v824
    %v826 = vmul.f32 %v824, %v825
    %v827 = vsub.f32 1.0, %v826
    %v828 = vmul.f32 %v825, %v827
    %v829 = vadd.f32 %v825, %v828
    %vm830 = vweird.f32 %v824
    %vm831 = vweird.f32 %v825
    %vm832 = vmor %vm830, %vm831
    %v833 = vsel %vm832, %v825, %v829
    %v834 = vand.u32 2147483647, %v824
    %vm835 = vcmp.eq.f32.partialorder %v834, 8.507059e+37
    %v836 = vand.u32 %v824, 2147483648
    %v837 = vor.u32 1.1754944e-38, %v836
    %v838 = vsel %vm835, %v837, %v833
    %v839 = vmul.f32 1.0, %v838
    %v840 = vmul.f32 %v818, %v839
    %v841 = vpack.c.bf16 %v840, %v840
    %s842 = scalar_lea.vmem [#allocation2], 320
    %v843 = vld [vmem:[%s842] sm:$0xf]
    %v844 = vld [vmem:[%s842 + $0x4] sm:$0xf]
    %v845 = vld [vmem:[%s842 + $0x8] sm:$0xf]
    %v846 = vld [vmem:[%s842 + $0xc] sm:$0xf]
    %v847 = vld [vmem:[%s842 + $0x10] sm:$0xf]
    %v848 = vld [vmem:[%s842 + $0x14] sm:$0xf]
    %v849 = vld [vmem:[%s842 + $0x18] sm:$0xf]
    %v850 = vld [vmem:[%s842 + $0x1c] sm:$0xf]
    %v851 = vld [vmem:[%s842 + $0x20] sm:$0xf]
    %v852 = vld [vmem:[%s842 + $0x24] sm:$0xf]
    %v853 = vld [vmem:[%s842 + $0x28] sm:$0xf]
    %v854 = vld [vmem:[%s842 + $0x2c] sm:$0xf]
    %v855 = vld [vmem:[%s842 + $0x30] sm:$0xf]
    %v856 = vld [vmem:[%s842 + $0x34] sm:$0xf]
    %v857 = vld [vmem:[%s842 + $0x38] sm:$0xf]
    %v858 = vld [vmem:[%s842 + $0x3c] sm:$0xf]
    %v859 = vperm.slane %v529, 3
    %v876 = vunpack.c.l.b16 %v843
    %v877 = vunpack.c.l.b16 %v844
    %v878 = vunpack.c.l.b16 %v845
    %v879 = vunpack.c.l.b16 %v846
    %v880 = vunpack.c.l.b16 %v847
    %v881 = vunpack.c.l.b16 %v848
    %v882 = vunpack.c.l.b16 %v849
    %v883 = vunpack.c.l.b16 %v850
    %v884 = vunpack.c.l.b16 %v851
    %v885 = vunpack.c.l.b16 %v852
    %v886 = vunpack.c.l.b16 %v853
    %v887 = vunpack.c.l.b16 %v854
    %v888 = vunpack.c.l.b16 %v855
    %v889 = vunpack.c.l.b16 %v856
    %v890 = vunpack.c.l.b16 %v857
    %v891 = vunpack.c.l.b16 %v858
    %v892 = vpack.c.b16 %v877, %v876
    %v893 = vpack.c.b16 %v879, %v878
    %v894 = vpack.c.b16 %v881, %v880
    %v895 = vpack.c.b16 %v883, %v882
    %v896 = vpack.c.b16 %v885, %v884
    %v897 = vpack.c.b16 %v887, %v886
    %v898 = vpack.c.b16 %v889, %v888
    %v899 = vpack.c.b16 %v891, %v890
    %908 = vmatpush.bf16.msra.mxu0 %v899
    %909 = vmatpush.bf16.msra.mxu0 %v898
    %910 = vmatpush.bf16.msra.mxu0 %v897
    %911 = vmatpush.bf16.msra.mxu0 %v896
    %912 = vmatpush.bf16.msra.mxu0 %v895
    %913 = vmatpush.bf16.msra.mxu0 %v894
    %914 = vmatpush.bf16.msra.mxu0 %v893
    %915 = vmatpush.bf16.msra.mxu0 %v892
    %916 = vmatmul.bf16.gmra.mxu0 %v841
    %v917 = vpop.f32.mrf.mxu0
    %v918 = vadd.f32 %v859, %v917
    %v919 = vpop.f32.mrf.mxu0
    %920 = vdwg.mxu0
    %v921 = vxor.u32 %v918, 2147483648
    %v922 = vmul.f32 %v921, 1.442695
    %v923 = vpow.pop %v922
    %v924 = vadd.f32 %v923, 1.0
    %v925 = vrcp.pop %v924
    %v926 = vmul.f32 %v924, %v925
    %v927 = vsub.f32 1.0, %v926
    %v928 = vmul.f32 %v925, %v927
    %v929 = vadd.f32 %v925, %v928
    %vm930 = vweird.f32 %v924
    %vm931 = vweird.f32 %v925
    %vm932 = vmor %vm930, %vm931
    %v933 = vsel %vm932, %v925, %v929
    %v934 = vand.u32 2147483647, %v924
    %vm935 = vcmp.eq.f32.partialorder %v934, 8.507059e+37
    %v936 = vand.u32 %v924, 2147483648
    %v937 = vor.u32 1.1754944e-38, %v936
    %v938 = vsel %vm935, %v937, %v933
    %v939 = vmul.f32 1.0, %v938
    %v940 = vmul.f32 %v918, %v939
    %v941 = vadd.f32 %v527, %v940
    %v942 = vmul.f32 %v941, 0.70710677
    %943 = vst [vmem:[#allocation5] sm:$0xff] %v942
    // Predicated region
    $region34: #{tpu_custom_call.1} parent=1 // pred_check
      _
    $region35: #{tpu_custom_call.1} parent=1 // pred_check_branch
      %945 = sbr.rel (0) target = $region37
    $region36: #{tpu_custom_call.1} parent=1 // pred_region
      %947 = vsyncadd [#allocation4], 0
      %s949 = sshll.u32 [#allocation5], 4
      %s950 = int_to_ptr.vmem [resolvable:$true] %s949
      %s951 = sshll.u32 %s7, 4
      %s952 = int_to_ptr.hbm [resolvable:$true] %s951
      %954 = dma.vmem_to_hbm [thread:$0]  %s950, 128, %s952, [#allocation4]
    $region37: #{tpu_custom_call.1} parent=1 // pred_fallthru
      _
    // Predicated region
    $region38: #{tpu_custom_call.1} parent=1 // pred_check
      _
    $region39: #{tpu_custom_call.1} parent=1 // pred_check_branch
      %956 = sbr.rel (0) target = $region41
    $region40: #{tpu_custom_call.1} parent=1 // pred_region
      %958 = dma.done [#allocation4], 128
    $region41: #{tpu_custom_call.1} parent=1 // pred_fallthru
      _
    %959 = vsyncpa [#allocation3], 1
    %960 = vsyncpa [#allocation4], 1

</llo_original>
